<compile_context>
chip_gen: v5e
topology: v5e:2x2
jax: 0.10.0
libtpu: 0.0.40
codegen_flags: <defaults>
</compile_context>

<pallas_src>
import jax
import jax.numpy as jnp
from jax.experimental import pallas as pl
from jax.experimental.pallas import tpu as pltpu

_EPS = 1e-12


def _cosine_linear_kernel(x_ref, wt_ref, o_ref, acc_ref, xss_ref, wss_ref):
    k = pl.program_id(2)

    @pl.when(k == 0)
    def _init():
        acc_ref[...] = jnp.zeros_like(acc_ref)
        xss_ref[...] = jnp.zeros_like(xss_ref)
        wss_ref[...] = jnp.zeros_like(wss_ref)

    x = x_ref[...]      # (tm, tk), native dtype (bf16 stays bf16 on the MXU)
    wt = wt_ref[...]    # (tk, tn), native dtype

    # Un-normalized partial product on the MXU, f32 accumulation.
    acc_ref[...] += jnp.dot(x, wt, preferred_element_type=jnp.float32)

    # Partial sum-of-squares for the x row norms and W row norms (= columns
    # of W^T).  Redundant across the other grid axes but tiny VPU/XLU work.
    xf = x.astype(jnp.float32)
    wf = wt.astype(jnp.float32)
    xss_ref[...] += jnp.sum(xf * xf, axis=1, keepdims=True)   # (tm, 1)
    wss_ref[...] += jnp.sum(wf * wf, axis=0, keepdims=True)   # (1, tn)

    @pl.when(k == pl.num_programs(2) - 1)
    def _finalize():
        # F.normalize: v / max(||v||_2, eps)
        x_scale = 1.0 / jnp.maximum(jnp.sqrt(xss_ref[...]), _EPS)   # (tm, 1)
        w_scale = 1.0 / jnp.maximum(jnp.sqrt(wss_ref[...]), _EPS)   # (1, tn)
        o_ref[...] = (acc_ref[...] * x_scale * w_scale).astype(o_ref.dtype)


def _pick_tile(dim: int, pref: int, align: int) -> int:
    """Largest `align`-aligned divisor of `dim` that is <= pref; else full dim."""
    if dim <= pref:
        return dim
    t = (pref // align) * align
    while t >= align:
        if dim % t == 0:
            return t
        t -= align
    # Fall back to a single block spanning the whole axis (always legal).
    return dim


def cosine_linear(x: jax.Array, weights: jax.Array,
                  *, tm_pref: int = 256, tn_pref: int = 256, tk_pref: int = 512) -> jax.Array:
    """x: [batch, in_features], weights: [out_features, in_features]."""
    batch, in_features = x.shape
    out_features, in_features_w = weights.shape
    assert in_features == in_features_w

    out_dtype = jnp.result_type(x.dtype, weights.dtype)

    # Present W as [K, N]: lane-dense N output, no per-step RHS transpose.
    wt = weights.T

    # Tile sizes: sublane axis (M) aligned to 8, lane axes (K, N) to 128.
    # Small dims fall back to the full extent (legal per the (8,128) rule).
    tm = _pick_tile(batch, tm_pref, 8)
    tk = _pick_tile(in_features, tk_pref, 128)
    tn = _pick_tile(out_features, tn_pref, 128)

    grid = (batch // tm, out_features // tn, in_features // tk)

    in_bytes = jnp.dtype(x.dtype).itemsize
    w_bytes = jnp.dtype(weights.dtype).itemsize
    out_bytes = jnp.dtype(out_dtype).itemsize
    # Double-buffered input/output tiles + f32 scratch (+ layout slack).
    est = (2 * tm * tk * in_bytes + 2 * tk * tn * w_bytes
           + 2 * tm * tn * out_bytes + (tm * tn + 128 * (tm + tn)) * 4)
    vmem_limit = int(min(max(2 * est, 16 * 1024 * 1024), 64 * 1024 * 1024))

    return pl.pallas_call(
        _cosine_linear_kernel,
        out_shape=jax.ShapeDtypeStruct((batch, out_features), out_dtype),
        grid_spec=pltpu.PrefetchScalarGridSpec(
            num_scalar_prefetch=0,
            grid=grid,
            in_specs=[
                pl.BlockSpec((tm, tk), lambda i, j, k: (i, k)),
                pl.BlockSpec((tk, tn), lambda i, j, k: (k, j)),
            ],
            out_specs=pl.BlockSpec((tm, tn), lambda i, j, k: (i, j)),
            scratch_shapes=[
                pltpu.VMEM((tm, tn), jnp.float32),   # f32 matmul accumulator
                pltpu.VMEM((tm, 1), jnp.float32),    # sum(x^2) per row
                pltpu.VMEM((1, tn), jnp.float32),    # sum(W^2) per output unit
            ],
        ),
        compiler_params=pltpu.CompilerParams(
            dimension_semantics=("parallel", "parallel", "arbitrary"),
            vmem_limit_bytes=vmem_limit,
        ),
    )(x, wt)


def init_cosine_linear_weights(key, in_features: int, out_features: int) -> jax.Array:
    # nn.init.xavier_normal_(W, gain=1): std = gain * sqrt(2 / (fan_in + fan_out))
    std = (2.0 / (in_features + out_features)) ** 0.5
    return std * jax.random.normal(key, (out_features, in_features), dtype=jnp.float32)


def _reference(x, w):
    xf = x.astype(jnp.float32)
    wf = w.astype(jnp.float32)
    x_n = xf / jnp.maximum(jnp.linalg.norm(xf, axis=-1, keepdims=True), _EPS)
    w_n = wf / jnp.maximum(jnp.linalg.norm(wf, axis=-1, keepdims=True), _EPS)
    return jnp.dot(x_n, w_n.T, precision=jax.lax.Precision.HIGHEST)


if __name__ == "__main__":
    key = jax.random.PRNGKey(0)
    k_x, k_w, k_x2, k_w2, k_x3, k_w3 = jax.random.split(key, 6)

    # 1) Small f32 case consistent with the module (single tile).
    batch, in_features, out_features = 8, 32, 16
    x = jax.random.normal(k_x, (batch, in_features), dtype=jnp.float32)
    w = init_cosine_linear_weights(k_w, in_features, out_features)
    y = cosine_linear(x, w)
    jax.block_until_ready(y)
    assert y.shape == (batch, out_features) and y.dtype == jnp.float32
    assert jnp.allclose(y, _reference(x, w), atol=1e-5, rtol=1e-5)

    # 2) f32 case exercising the tiled (M, N, K) grid with K accumulation.
    batch, in_features, out_features = 64, 1024, 384
    x2 = jax.random.normal(k_x2, (batch, in_features), dtype=jnp.float32)
    w2 = init_cosine_linear_weights(k_w2, in_features, out_features)
    y2 = cosine_linear(x2, w2)
    jax.block_until_ready(y2)
    assert jnp.allclose(y2, _reference(x2, w2), atol=1e-3, rtol=1e-3)

    # 3) bf16 inputs: fed to the MXU in bf16, output stays bf16.
    batch, in_features, out_features = 32, 256, 128
    x3 = jax.random.normal(k_x3, (batch, in_features), dtype=jnp.float32).astype(jnp.bfloat16)
    w3 = init_cosine_linear_weights(k_w3, in_features, out_features).astype(jnp.bfloat16)
    y3 = cosine_linear(x3, w3)
    jax.block_until_ready(y3)
    assert y3.dtype == jnp.bfloat16
    assert jnp.allclose(y3.astype(jnp.float32), _reference(x3, w3), atol=2e-2, rtol=2e-2)

    print("KERNEL_OK")
</pallas_src>

<mosaic_0001>
module attributes {stable_mosaic.version = 11 : i64} {
  func.func @_cosine_linear_kernel(%arg0: i32, %arg1: i32, %arg2: i32, %arg3: memref<8x32xf32, #tpu.memory_space<vmem>>, %arg4: memref<32x16xf32, #tpu.memory_space<vmem>>, %arg5: memref<8x16xf32, #tpu.memory_space<vmem>>, %arg6: memref<8x16xf32, #tpu.memory_space<vmem>>, %arg7: memref<8x1xf32, #tpu.memory_space<vmem>>, %arg8: memref<1x16xf32, #tpu.memory_space<vmem>>) attributes {dimension_semantics = [#tpu.dimension_semantics<parallel>, #tpu.dimension_semantics<parallel>, #tpu.dimension_semantics<arbitrary>], iteration_bounds = array<i64: 1, 1, 1>, scalar_prefetch = 0 : i64, scratch_operands = 3 : i64, tpu.core_type = #tpu.core_type<tc>, window_params = [{transform_indices = @transform_0, window_bounds = array<i64: 8, 32>}, {transform_indices = @transform_1, window_bounds = array<i64: 32, 16>}, {transform_indices = @transform_2, window_bounds = array<i64: 8, 16>}]} {
    %c0_i32 = arith.constant 0 : i32
    %0 = arith.cmpi eq, %arg2, %c0_i32 : i32
    %1 = arith.extui %0 : i1 to i32
    %c0_i32_0 = arith.constant 0 : i32
    %2 = arith.cmpi ne, %1, %c0_i32_0 : i32
    scf.if %2 {
      %cst_20 = arith.constant 0.000000e+00 : f32
      %24 = vector.broadcast %cst_20 : f32 to vector<8x16xf32>
      %c0_21 = arith.constant 0 : index
      %c0_22 = arith.constant 0 : index
      %25 = vector.load %arg6[%c0_21, %c0_22] : memref<8x16xf32, #tpu.memory_space<vmem>>, vector<8x16xf32>
      tpu.vector_store %arg6[%c0_21, %c0_22], %24 {strides = array<i32>} : memref<8x16xf32, #tpu.memory_space<vmem>>, vector<8x16xf32>,
      %cst_23 = arith.constant 0.000000e+00 : f32
      %26 = vector.broadcast %cst_23 : f32 to vector<8x1xf32>
      %c0_24 = arith.constant 0 : index
      %c0_25 = arith.constant 0 : index
      %27 = vector.load %arg7[%c0_24, %c0_25] : memref<8x1xf32, #tpu.memory_space<vmem>>, vector<8x1xf32>
      tpu.vector_store %arg7[%c0_24, %c0_25], %26 {strides = array<i32>} : memref<8x1xf32, #tpu.memory_space<vmem>>, vector<8x1xf32>,
      %cst_26 = arith.constant 0.000000e+00 : f32
      %28 = vector.broadcast %cst_26 : f32 to vector<1x16xf32>
      %c0_27 = arith.constant 0 : index
      %c0_28 = arith.constant 0 : index
      %29 = vector.load %arg8[%c0_27, %c0_28] : memref<1x16xf32, #tpu.memory_space<vmem>>, vector<1x16xf32>
      tpu.vector_store %arg8[%c0_27, %c0_28], %28 {strides = array<i32>} : memref<1x16xf32, #tpu.memory_space<vmem>>, vector<1x16xf32>,
    } else {
    }
    %c0 = arith.constant 0 : index
    %c0_1 = arith.constant 0 : index
    %3 = vector.load %arg3[%c0, %c0_1] : memref<8x32xf32, #tpu.memory_space<vmem>>, vector<8x32xf32>
    %c0_2 = arith.constant 0 : index
    %c0_3 = arith.constant 0 : index
    %4 = vector.load %arg4[%c0_2, %c0_3] : memref<32x16xf32, #tpu.memory_space<vmem>>, vector<32x16xf32>
    %c0_4 = arith.constant 0 : index
    %c0_5 = arith.constant 0 : index
    %5 = vector.load %arg6[%c0_4, %c0_5] : memref<8x16xf32, #tpu.memory_space<vmem>>, vector<8x16xf32>
    %cst = arith.constant dense<0.000000e+00> : vector<8x16xf32>
    %6 = tpu.matmul %3, %4, %cst {dimension_numbers = #tpu.dot_dimension_numbers<[1], [0], [0], [1], [0, 0, 1, 1], [], []>} : vector<8x32xf32>, vector<32x16xf32>, vector<8x16xf32> -> vector<8x16xf32>
    %7 = arith.addf %5, %6 : vector<8x16xf32>
    %c0_6 = arith.constant 0 : index
    %c0_7 = arith.constant 0 : index
    %8 = vector.load %arg6[%c0_6, %c0_7] : memref<8x16xf32, #tpu.memory_space<vmem>>, vector<8x16xf32>
    tpu.vector_store %arg6[%c0_6, %c0_7], %7 {strides = array<i32>} : memref<8x16xf32, #tpu.memory_space<vmem>>, vector<8x16xf32>,
    %c0_8 = arith.constant 0 : index
    %c0_9 = arith.constant 0 : index
    %9 = vector.load %arg7[%c0_8, %c0_9] : memref<8x1xf32, #tpu.memory_space<vmem>>, vector<8x1xf32>
    %10 = arith.mulf %3, %3 : vector<8x32xf32>
    %cst_10 = arith.constant dense<0.000000e+00> : vector<8xf32>
    %11 = vector.multi_reduction <add>, %10, %cst_10 [1] : vector<8x32xf32> to vector<8xf32>
    %12 = vector.shape_cast %11 : vector<8xf32> to vector<8x1xf32>
    %13 = arith.addf %9, %12 : vector<8x1xf32>
    %c0_11 = arith.constant 0 : index
    %c0_12 = arith.constant 0 : index
    %14 = vector.load %arg7[%c0_11, %c0_12] : memref<8x1xf32, #tpu.memory_space<vmem>>, vector<8x1xf32>
    tpu.vector_store %arg7[%c0_11, %c0_12], %13 {strides = array<i32>} : memref<8x1xf32, #tpu.memory_space<vmem>>, vector<8x1xf32>,
    %c0_13 = arith.constant 0 : index
    %c0_14 = arith.constant 0 : index
    %15 = vector.load %arg8[%c0_13, %c0_14] : memref<1x16xf32, #tpu.memory_space<vmem>>, vector<1x16xf32>
    %16 = arith.mulf %4, %4 : vector<32x16xf32>
    %cst_15 = arith.constant dense<0.000000e+00> : vector<16xf32>
    %17 = vector.multi_reduction <add>, %16, %cst_15 [0] : vector<32x16xf32> to vector<16xf32>
    %18 = vector.shape_cast %17 : vector<16xf32> to vector<1x16xf32>
    %19 = arith.addf %15, %18 : vector<1x16xf32>
    %c0_16 = arith.constant 0 : index
    %c0_17 = arith.constant 0 : index
    %20 = vector.load %arg8[%c0_16, %c0_17] : memref<1x16xf32, #tpu.memory_space<vmem>>, vector<1x16xf32>
    tpu.vector_store %arg8[%c0_16, %c0_17], %19 {strides = array<i32>} : memref<1x16xf32, #tpu.memory_space<vmem>>, vector<1x16xf32>,
    %c0_i32_18 = arith.constant 0 : i32
    %21 = arith.cmpi eq, %arg2, %c0_i32_18 : i32
    %22 = arith.extui %21 : i1 to i32
    %c0_i32_19 = arith.constant 0 : i32
    %23 = arith.cmpi ne, %22, %c0_i32_19 : i32
    scf.if %23 {
      %c0_20 = arith.constant 0 : index
      %c0_21 = arith.constant 0 : index
      %24 = vector.load %arg7[%c0_20, %c0_21] : memref<8x1xf32, #tpu.memory_space<vmem>>, vector<8x1xf32>
      %25 = math.sqrt %24 : vector<8x1xf32>
      %cst_22 = arith.constant 9.99999996E-13 : f32
      %26 = vector.broadcast %cst_22 : f32 to vector<8x1xf32>
      %27 = arith.maximumf %25, %26 : vector<8x1xf32>
      %cst_23 = arith.constant 1.000000e+00 : f32
      %28 = vector.broadcast %cst_23 : f32 to vector<8x1xf32>
      %29 = arith.divf %28, %27 : vector<8x1xf32>
      %c0_24 = arith.constant 0 : index
      %c0_25 = arith.constant 0 : index
      %30 = vector.load %arg8[%c0_24, %c0_25] : memref<1x16xf32, #tpu.memory_space<vmem>>, vector<1x16xf32>
      %31 = math.sqrt %30 : vector<1x16xf32>
      %cst_26 = arith.constant 9.99999996E-13 : f32
      %32 = vector.broadcast %cst_26 : f32 to vector<1x16xf32>
      %33 = arith.maximumf %31, %32 : vector<1x16xf32>
      %cst_27 = arith.constant 1.000000e+00 : f32
      %34 = vector.broadcast %cst_27 : f32 to vector<1x16xf32>
      %35 = arith.divf %34, %33 : vector<1x16xf32>
      %c0_28 = arith.constant 0 : index
      %c0_29 = arith.constant 0 : index
      %36 = vector.load %arg6[%c0_28, %c0_29] : memref<8x16xf32, #tpu.memory_space<vmem>>, vector<8x16xf32>
      %37 = vector.broadcast %29 : vector<8x1xf32> to vector<8x16xf32>
      %38 = arith.mulf %36, %37 : vector<8x16xf32>
      %39 = vector.broadcast %35 : vector<1x16xf32> to vector<8x16xf32>
      %40 = arith.mulf %38, %39 : vector<8x16xf32>
      %c0_30 = arith.constant 0 : index
      %c0_31 = arith.constant 0 : index
      %41 = vector.load %arg5[%c0_30, %c0_31] : memref<8x16xf32, #tpu.memory_space<vmem>>, vector<8x16xf32>
      tpu.vector_store %arg5[%c0_30, %c0_31], %40 {strides = array<i32>} : memref<8x16xf32, #tpu.memory_space<vmem>>, vector<8x16xf32>,
    } else {
    }
    return
  }
  func.func @transform_0(%arg0: i32, %arg1: i32, %arg2: i32) -> (i32, i32) {
    %c0_i32 = arith.constant 0 : i32
    return %arg0, %arg2 : i32, i32
  }
  func.func @transform_1(%arg0: i32, %arg1: i32, %arg2: i32) -> (i32, i32) {
    %c0_i32 = arith.constant 0 : i32
    return %arg2, %arg1 : i32, i32
  }
  func.func @transform_2(%arg0: i32, %arg1: i32, %arg2: i32) -> (i32, i32) {
    %c0_i32 = arith.constant 0 : i32
    return %arg0, %arg1 : i32, i32
  }
}

</mosaic_0001>

<llo_original>
// kernel: tpu_custom_call.1
$region0: #{tpu_custom_call.1}
  #allocation0 [shape = 'u32[]', space=smem, size = 0x4, offset = 0x4, fixed_abs, tag = 'smem constant byte address 0x4 - core index']
  #allocation1 [shape = 'u32[72,128]{1,0:T(1,128)}', space=vmem, size = 0x9000, scoped, tag = 'internal scratch']
  #allocation2 [shape = 'f32[8,16]{1,0:T(8,128)}', space=vmem, size = 0x1000, scoped, tag = 'scratch operand']
  #allocation3 [shape = 'f32[8,1]{1,0:T(8,128)}', space=vmem, size = 0x1000, scoped, tag = 'scratch operand']
  #allocation4 [shape = 'f32[1,16]{1,0:T(1,128)}', space=vmem, size = 0x200, scoped, tag = 'scratch operand']
  %s0 = inlined_call_operand.vmem [shape: f32[8,32], index: 0, kind: input, shape index: {}]
  %s1 = inlined_call_operand.vmem [shape: f32[32,16], index: 1, kind: input, shape index: {}]
  %s2 = inlined_call_operand.hbm [shape: f32[8,16], index: 2, kind: output, shape index: {}]
  %s3 = sld [smem:[#allocation0]]
  $region26: #{tpu_custom_call.1} parent=0
    _
  %s5 = ssub.s32 1, %s3
  %s6 = scalar_select 0, %s5, %s3
  $region1: #{tpu_custom_call.1} parent=0
    #allocation5 [shape = 'u8[4096]{0}', space=vmem, size = 0x1000, scoped, tag = 'output window, operand 0, single buffered']
    #allocation6 [shape = 's32[1]{0}', space=sflag, size = 0x4, scoped, tag = 'scoped memory for tpu_custom_call.1']
    %7 = vsyncpa [#allocation6], 0
    // Predicated region
    $region2: #{tpu_custom_call.1} parent=1 // pred_check
      _
    $region3: #{tpu_custom_call.1} parent=1 // pred_check_branch
      %9 = sbr.rel (0) target = $region5
    $region4: #{tpu_custom_call.1} parent=1 // pred_region
      _
    $region5: #{tpu_custom_call.1} parent=1 // pred_fallthru
      _
    // Predicated region
    $region6: #{tpu_custom_call.1} parent=1 // pred_check
      _
    $region7: #{tpu_custom_call.1} parent=1 // pred_check_branch
      %11 = sbr.rel (0) target = $region9
    $region8: #{tpu_custom_call.1} parent=1 // pred_region
      _
    $region9: #{tpu_custom_call.1} parent=1 // pred_fallthru
      _
    %p12 = scmp.eq.s32.totalorder 0, 0
    // Predicated region
    $region10: #{tpu_custom_call.1} parent=1 // pred_check
      %p13 = pneg %p12
    $region11: #{tpu_custom_call.1} parent=1 // pred_check_branch
      %15 = sbr.rel (%p13) target = $region13
    $region12: #{tpu_custom_call.1} parent=1 // pred_region
      %vm16 = vcmask 130048
      %17 = vst.msk [vmem:[#allocation2] sm:$0xff] %vm16, 0.0
      %vm18 = vcmask 7168
      %19 = vst.msk [vmem:[#allocation3] sm:$0xff] %vm18, 0.0
      %vm20 = vcmask 122880
      %21 = vst.msk [vmem:[#allocation4] sm:$0x1] %vm20, 0.0
    $region13: #{tpu_custom_call.1} parent=1 // pred_fallthru
      _
    %v22 = vld [vmem:[%s0] sm:$0xff]
    %v23 = vld [vmem:[%s1] sm:$0xff]
    %v24 = vld [vmem:[%s1 + $0x8] sm:$0xff]
    %v25 = vld [vmem:[%s1 + $0x10] sm:$0xff]
    %v26 = vld [vmem:[%s1 + $0x18] sm:$0xff]
    %v27 = vld [vmem:[#allocation2] sm:$0xff]
    %vm28 = vcmask 261120
    %v30 = vsel %vm28, %v22, 0
    %32 = vmatpush.msra.mxu0 0.0
    %33 = vmatpush.msra.mxu0 0.0
    %34 = vmatpush.msra.mxu0 0.0
    %35 = vmatpush.msra.mxu0 0.0
    %36 = vmatpush.msra.mxu0 0.0
    %37 = vmatpush.msra.mxu0 0.0
    %38 = vmatpush.msra.mxu0 0.0
    %39 = vmatpush.msra.mxu0 0.0
    %40 = vmatpush.msra.mxu0 0.0
    %41 = vmatpush.msra.mxu0 0.0
    %42 = vmatpush.msra.mxu0 0.0
    %43 = vmatpush.msra.mxu0 0.0
    %44 = vmatpush.msra.mxu0 %v26
    %45 = vmatpush.msra.mxu0 %v25
    %46 = vmatpush.msra.mxu0 %v24
    %47 = vmatpush.msra.mxu0 %v23
    %48 = vmatmul.f32.gmra.mxu0 %v30
    %v49 = vpop.f32.mrf.mxu0
    %v50 = vadd.f32 0.0, %v49
    %51 = vdwg.mxu0
    %v52 = vadd.f32 %v27, %v50
    %vm53 = vcmask 130048
    %54 = vst.msk [vmem:[#allocation2] sm:$0xff] %vm53, %v52
    %v55 = vld [vmem:[#allocation3] sm:$0xff]
    %v56 = vmul.f32 %v22, %v22
    %v57 = vsel %vm28, %v56, 0.0
    %58 = vadd.xlane.f32.xlu0 %v57
    %v59 = vpop.xlane.xlu0 %58
    %v60 = vadd.f32 %v55, %v59
    %vm61 = vcmask 7168
    %62 = vst.msk [vmem:[#allocation3] sm:$0xff] %vm61, %v60
    %v63 = vld [vmem:[#allocation4] sm:$0x1]
    %v64 = vmul.f32 %v23, %v23
    %v65 = vmul.f32 %v24, %v24
    %v66 = vmul.f32 %v25, %v25
    %v67 = vmul.f32 %v26, %v26
    %v68 = vsel %vm53, %v64, 0.0
    %v69 = vsel %vm53, %v65, 0.0
    %v70 = vadd.f32 %v68, %v69
    %v71 = vsel %vm53, %v66, 0.0
    %v72 = vadd.f32 %v70, %v71
    %v73 = vsel %vm53, %v67, 0.0
    %v74 = vadd.f32 %v72, %v73
    %v75 = vrot.slane %v74, 4
    %v76 = vadd.f32 %v74, %v75
    %v77 = vrot.slane %v76, 2
    %v78 = vadd.f32 %v76, %v77
    %v79 = vrot.slane %v78, 1
    %v80 = vadd.f32 %v78, %v79
    %v81 = vadd.f32 %v63, %v80
    %vm82 = vcmask 122880
    %83 = vst.msk [vmem:[#allocation4] sm:$0x1] %vm82, %v81
    // Predicated region
    $region14: #{tpu_custom_call.1} parent=1 // pred_check
      %p84 = pneg %p12
    $region15: #{tpu_custom_call.1} parent=1 // pred_check_branch
      %86 = sbr.rel (%p84) target = $region17
    $region16: #{tpu_custom_call.1} parent=1 // pred_region
      %v87 = vld [vmem:[#allocation3] sm:$0xff]
      %v88 = vrsqrt.pop %v87
      %v89 = vmul.f32 %v88, %v87
      %v90 = vmul.f32 %v89, %v88
      %v91 = vmul.f32 0.5, %v90
      %v92 = vsub.f32 1.5, %v91
      %v93 = vmul.f32 %v88, %v92
      %v94 = vmul.f32 %v87, %v93
      %vm95 = vcmp.eq.f32.partialorder %v87, inf
      %v96 = vsel %vm95, %v87, %v94
      %vm97 = vcmp.eq.f32.partialorder %v87, 0.0
      %v98 = vand.u32 %v87, 2147483648
      %v99 = vsel %vm97, %v98, %v96
      %v100 = vmax.f32 %v99, 1e-12
      %v101 = vrcp.pop %v100
      %v102 = vmul.f32 %v100, %v101
      %v103 = vsub.f32 1.0, %v102
      %v104 = vmul.f32 %v101, %v103
      %v105 = vadd.f32 %v101, %v104
      %vm106 = vweird.f32 %v100
      %vm107 = vweird.f32 %v101
      %vm108 = vmor %vm106, %vm107
      %v109 = vsel %vm108, %v101, %v105
      %v110 = vand.u32 2147483647, %v100
      %vm111 = vcmp.eq.f32.partialorder %v110, 8.507059e+37
      %v112 = vand.u32 %v100, 2147483648
      %v113 = vor.u32 1.1754944e-38, %v112
      %v114 = vsel %vm111, %v113, %v109
      %v115 = vmul.f32 1.0, %v114
      %v116 = vld [vmem:[#allocation4] sm:$0x1]
      %v117 = vrsqrt.pop %v116
      %v118 = vmul.f32 %v117, %v116
      %v119 = vmul.f32 %v118, %v117
      %v120 = vmul.f32 0.5, %v119
      %v121 = vsub.f32 1.5, %v120
      %v122 = vmul.f32 %v117, %v121
      %v123 = vmul.f32 %v116, %v122
      %vm124 = vcmp.eq.f32.partialorder %v116, inf
      %v125 = vsel %vm124, %v116, %v123
      %vm126 = vcmp.eq.f32.partialorder %v116, 0.0
      %v127 = vand.u32 %v116, 2147483648
      %v128 = vsel %vm126, %v127, %v125
      %v129 = vmax.f32 %v128, 1e-12
      %v130 = vrcp.pop %v129
      %v131 = vmul.f32 %v129, %v130
      %v132 = vsub.f32 1.0, %v131
      %v133 = vmul.f32 %v130, %v132
      %v134 = vadd.f32 %v130, %v133
      %vm135 = vweird.f32 %v129
      %vm136 = vweird.f32 %v130
      %vm137 = vmor %vm135, %vm136
      %v138 = vsel %vm137, %v130, %v134
      %v139 = vand.u32 2147483647, %v129
      %vm140 = vcmp.eq.f32.partialorder %v139, 8.507059e+37
      %v141 = vand.u32 %v129, 2147483648
      %v142 = vor.u32 1.1754944e-38, %v141
      %v143 = vsel %vm140, %v142, %v138
      %v144 = vmul.f32 1.0, %v143
      %v145 = vld [vmem:[#allocation2] sm:$0xff]
      %147 = vset.pattern.permute.xlu0 0
      %148 = vperm.xlu0 %147, %v115
      %v149 = vpop.permute.xlu0 %148
      %v151 = vmul.f32 %v145, %v149
      %v153 = vperm.slane %v144, 0
      %v155 = vmul.f32 %v151, %v153
      %156 = vst.msk [vmem:[#allocation5] sm:$0xff] %vm53, %v155
    $region17: #{tpu_custom_call.1} parent=1 // pred_fallthru
      _
    // Predicated region
    $region18: #{tpu_custom_call.1} parent=1 // pred_check
      _
    $region19: #{tpu_custom_call.1} parent=1 // pred_check_branch
      %158 = sbr.rel (0) target = $region21
    $region20: #{tpu_custom_call.1} parent=1 // pred_region
      %160 = vsyncadd [#allocation6], 0
      %s162 = sshll.u32 [#allocation5], 4
      %s163 = int_to_ptr.vmem [resolvable:$true] %s162
      %s164 = sshll.u32 %s2, 4
      %s165 = int_to_ptr.hbm [resolvable:$true] %s164
      %167 = dma.vmem_to_hbm [thread:$0]  %s163, 128, %s165, [#allocation6]
    $region21: #{tpu_custom_call.1} parent=1 // pred_fallthru
      _
    // Predicated region
    $region22: #{tpu_custom_call.1} parent=1 // pred_check
      _
    $region23: #{tpu_custom_call.1} parent=1 // pred_check_branch
      %169 = sbr.rel (0) target = $region25
    $region24: #{tpu_custom_call.1} parent=1 // pred_region
      %171 = dma.done [#allocation6], 128
    $region25: #{tpu_custom_call.1} parent=1 // pred_fallthru
      _
    %172 = vsyncpa [#allocation6], 1

</llo_original>
